<compile_context>
chip_gen: v7x
topology: tpu7x:2x2x1
jax: 0.10.0
libtpu: 0.0.40
codegen_flags: <defaults>
</compile_context>

<pallas_src>
import jax
import jax.numpy as jnp
from jax.experimental import pallas as pl
from jax.experimental.pallas import tpu as pltpu

INPUT_SIZE = 1
HIDDEN_SIZE = 64
HIDDEN_LAYERS = 2
OUTPUT_SIZE = 1


def _round_up(n, m):
    return ((n + m - 1) // m) * m


def _cdiv(a, b):
    return (a + b - 1) // b


def _vmem_limit_bytes(block_b):
    """Size scoped VMEM for the live activation slabs + double-buffered I/O tiles."""
    act_f32 = 3 * HIDDEN_SIZE * block_b * 4      # live f32 [64, block_b] slabs
    act_bf16 = 2 * HIDDEN_SIZE * block_b * 2     # bf16 copies fed to the MXU
    io = 2 * 2 * block_b * 4                     # double-buffered [1, block_b] x / o tiles
    weights = 2 * 64 * 1024                      # resident weights/biases (generous)
    est = 2 * (act_f32 + act_bf16 + io) + weights
    # Keep within every generation's budget (v7x: 64 MiB physical VMEM).
    return int(min(max(est, 16 * 1024 * 1024), 48 * 1024 * 1024))


def xknet_kernel(x_ref,
                 w0_ref, b0_ref,
                 w1_ref, b1_ref,
                 w2_ref, b2_ref,
                 w3_ref, b3_ref,
                 o_ref):
    """Fused 4-layer MLP for one batch tile, batch on the lane axis.

    x_ref:  (1, block_b)      o_ref: (1, block_b)
    w1_ref / w2_ref are bf16; accumulation is f32.
    """
    x = x_ref[...]  # (1, block_b) f32

    # Layer 0: Linear(1, 64) + ReLU.  K=1 matmul -> VPU outer-product broadcast instead
    # of a degenerate MXU pass:  [64,1] * [1,block_b] -> [64,block_b]
    h = jnp.maximum(w0_ref[...] * x + b0_ref[...], 0.0)

    # Layer 1: Linear(64, 64) + ReLU on the MXU (wide streaming N = block_b, bf16 in,
    # f32 accumulate).
    h = jnp.maximum(
        jnp.dot(w1_ref[...], h.astype(w1_ref.dtype),
                preferred_element_type=jnp.float32) + b1_ref[...],
        0.0)

    # Layer 2: Linear(64, 64) + ReLU on the MXU.
    h = jnp.maximum(
        jnp.dot(w2_ref[...], h.astype(w2_ref.dtype),
                preferred_element_type=jnp.float32) + b2_ref[...],
        0.0)

    # Output layer: Linear(64, 1), no activation.  N=1 matmul -> VPU multiply + sublane
    # reduction (XLU), result stays lane-dense as [1, block_b] for an unmasked store.
    out = jnp.sum(w3_ref[...] * h, axis=0, keepdims=True) + b3_ref[...]
    o_ref[...] = out.astype(o_ref.dtype)


def xknet_forward(x, params, *, tile_b=8192, min_tiles=2, mxu_dtype=jnp.bfloat16):
    """x: [B, 1] float32.  Returns [B, 1] float32.

    params: ((w0,b0),(w1,b1),(w2,b2),(w3,b3)) in the layout documented above.
    tile_b:    max batch tile (lane) width; must be a multiple of 128.
    min_tiles: minimum number of grid steps when B is large enough (>= min_tiles*128),
               so the 'parallel' axis can be split across v7x's two TensorCores.
    mxu_dtype: operand dtype for the two 64x64 MXU matmuls (accumulation stays f32).
    """
    B, in_dim = x.shape
    assert in_dim == INPUT_SIZE
    assert tile_b % 128 == 0, "tile_b must be a multiple of 128"

    (w0, b0), (w1, b1), (w2, b2), (w3, b3) = params

    # Cast the two MXU weights once; everything else (biases, degenerate layers) stays f32.
    w1 = w1.astype(mxu_dtype)
    w2 = w2.astype(mxu_dtype)

    # Balanced tiling: split B into n roughly equal, 128-aligned tiles instead of
    # tile_b-sized tiles plus a mostly-padding remainder.
    n = _cdiv(B, tile_b)
    if B >= min_tiles * 128:
        n = max(n, min_tiles)
    if n > 1 and n % 2:
        n += 1  # even step count -> equal work on v7x's two TensorCores
    block_b = _round_up(_cdiv(B, n), 128)
    Bp = n * block_b

    # [B,1] -> [1,B] is a no-copy reshape (row-major), then pad the lane axis.
    xt = x.reshape(1, B)
    if Bp != B:
        xt = jnp.pad(xt, ((0, 0), (0, Bp - B)))

    full = lambda shape: pl.BlockSpec(shape, lambda i: (0, 0))

    grid_spec = pltpu.PrefetchScalarGridSpec(
        num_scalar_prefetch=0,
        grid=(n,),
        in_specs=[
            pl.BlockSpec((1, block_b), lambda i: (0, i)),   # x tile (lane-dense)
            full(w0.shape), full(b0.shape),
            full(w1.shape), full(b1.shape),
            full(w2.shape), full(b2.shape),
            full(w3.shape), full(b3.shape),
        ],
        out_specs=pl.BlockSpec((1, block_b), lambda i: (0, i)),  # lane-dense output
    )

    out_t = pl.pallas_call(
        xknet_kernel,
        out_shape=jax.ShapeDtypeStruct((1, Bp), jnp.float32),
        grid_spec=grid_spec,
        compiler_params=pltpu.CompilerParams(
            dimension_semantics=("parallel",),
            vmem_limit_bytes=_vmem_limit_bytes(block_b)),
    )(xt, w0, b0, w1, b1, w2, b2, w3, b3)

    return out_t[:, :B].reshape(B, OUTPUT_SIZE)  # back to [B, 1], no-copy reshape


def init_params(key):
    """Deterministic init matching XKnet's layer shapes, in kernel layout.

    Torch-Linear-style uniform(-1/sqrt(fan_in), 1/sqrt(fan_in)) bounds.
    """
    dims = [(INPUT_SIZE, HIDDEN_SIZE),
            (HIDDEN_SIZE, HIDDEN_SIZE),
            (HIDDEN_SIZE, HIDDEN_SIZE),
            (HIDDEN_SIZE, OUTPUT_SIZE)]
    raw = []
    for (fan_in, fan_out) in dims:
        key, kw, kb = jax.random.split(key, 3)
        bound = 1.0 / jnp.sqrt(jnp.float32(fan_in))
        w = jax.random.uniform(kw, (fan_out, fan_in), jnp.float32, -bound, bound)  # [out, in]
        b = jax.random.uniform(kb, (fan_out,), jnp.float32, -bound, bound)
        raw.append((w, b))

    (W0, B0), (W1, B1), (W2, B2), (W3, B3) = raw
    params = (
        (W0, B0.reshape(HIDDEN_SIZE, 1)),                 # w0 [64,1], b0 [64,1]
        (W1, B1.reshape(HIDDEN_SIZE, 1)),                 # w1 [64,64], b1 [64,1]
        (W2, B2.reshape(HIDDEN_SIZE, 1)),                 # w2 [64,64], b2 [64,1]
        (W3.T, B3.reshape(1, 1)),                         # w3 [64,1],  b3 [1,1]
    )
    return params


def xknet_reference(x, params):
    """Plain-JAX f32 reference in the standard [batch, features] layout."""
    (w0, b0), (w1, b1), (w2, b2), (w3, b3) = params
    h = jnp.maximum(x @ w0.T + b0.T, 0.0)     # Linear(1,64) + ReLU
    h = jnp.maximum(h @ w1.T + b1.T, 0.0)     # Linear(64,64) + ReLU
    h = jnp.maximum(h @ w2.T + b2.T, 0.0)     # Linear(64,64) + ReLU
    return h @ w3 + b3                        # Linear(64,1)


if __name__ == "__main__":
    key = jax.random.PRNGKey(0)
    key, kx1, kx2 = jax.random.split(key, 3)
    params = init_params(key)

    # bf16 MXU operands (f32 accumulate) -> compare against the f32 reference with a
    # correspondingly loosened tolerance.
    ATOL = 2e-2
    RTOL = 2e-2

    # Case 1: small, non-multiple-of-128 batch (exercises padding + min_tiles=2 path).
    B1 = 300
    x1 = jax.random.normal(kx1, (B1, INPUT_SIZE), dtype=jnp.float32)
    out1 = jax.block_until_ready(xknet_forward(x1, params))
    ref1 = xknet_reference(x1, params)
    assert out1.shape == (B1, OUTPUT_SIZE)
    assert jnp.allclose(out1, ref1, atol=ATOL, rtol=RTOL)

    # Case 2: larger batch with tile_b=1024 -> balanced even split (4 tiles of 640, no
    # padding), multi-step parallel grid.
    B2 = 2560
    x2 = jax.random.normal(kx2, (B2, INPUT_SIZE), dtype=jnp.float32)
    out2 = jax.block_until_ready(xknet_forward(x2, params, tile_b=1024))
    ref2 = xknet_reference(x2, params)
    assert out2.shape == (B2, OUTPUT_SIZE)
    assert jnp.allclose(out2, ref2, atol=ATOL, rtol=RTOL)

    print("KERNEL_OK")
</pallas_src>

<mosaic_0001>
module attributes {stable_mosaic.version = 11 : i64} {
  func.func @xknet_kernel(%arg0: i32, %arg1: memref<1x256xf32, #tpu.memory_space<vmem>>, %arg2: memref<64x1xf32, #tpu.memory_space<vmem>>, %arg3: memref<64x1xf32, #tpu.memory_space<vmem>>, %arg4: memref<64x64xbf16, #tpu.memory_space<vmem>>, %arg5: memref<64x1xf32, #tpu.memory_space<vmem>>, %arg6: memref<64x64xbf16, #tpu.memory_space<vmem>>, %arg7: memref<64x1xf32, #tpu.memory_space<vmem>>, %arg8: memref<64x1xf32, #tpu.memory_space<vmem>>, %arg9: memref<1x1xf32, #tpu.memory_space<vmem>>, %arg10: memref<1x256xf32, #tpu.memory_space<vmem>>) attributes {dimension_semantics = [#tpu.dimension_semantics<parallel>], iteration_bounds = array<i64: 2>, scalar_prefetch = 0 : i64, scratch_operands = 0 : i64, tpu.core_type = #tpu.core_type<tc>, window_params = [{transform_indices = @transform_0, window_bounds = array<i64: 1, 256>}, {pipeline_mode = #tpu.pipeline_mode<synchronous>, transform_indices = @transform_1, window_bounds = array<i64: 64, 1>}, {pipeline_mode = #tpu.pipeline_mode<synchronous>, transform_indices = @transform_2, window_bounds = array<i64: 64, 1>}, {pipeline_mode = #tpu.pipeline_mode<synchronous>, transform_indices = @transform_3, window_bounds = array<i64: 64, 64>}, {pipeline_mode = #tpu.pipeline_mode<synchronous>, transform_indices = @transform_4, window_bounds = array<i64: 64, 1>}, {pipeline_mode = #tpu.pipeline_mode<synchronous>, transform_indices = @transform_5, window_bounds = array<i64: 64, 64>}, {pipeline_mode = #tpu.pipeline_mode<synchronous>, transform_indices = @transform_6, window_bounds = array<i64: 64, 1>}, {pipeline_mode = #tpu.pipeline_mode<synchronous>, transform_indices = @transform_7, window_bounds = array<i64: 64, 1>}, {pipeline_mode = #tpu.pipeline_mode<synchronous>, transform_indices = @transform_8, window_bounds = array<i64: 1, 1>}, {transform_indices = @transform_9, window_bounds = array<i64: 1, 256>}]} {
    %c0 = arith.constant 0 : index
    %c0_0 = arith.constant 0 : index
    %0 = vector.load %arg1[%c0, %c0_0] : memref<1x256xf32, #tpu.memory_space<vmem>>, vector<1x256xf32>
    %c0_1 = arith.constant 0 : index
    %c0_2 = arith.constant 0 : index
    %1 = vector.load %arg2[%c0_1, %c0_2] : memref<64x1xf32, #tpu.memory_space<vmem>>, vector<64x1xf32>
    %2 = vector.broadcast %1 : vector<64x1xf32> to vector<64x256xf32>
    %3 = vector.broadcast %0 : vector<1x256xf32> to vector<64x256xf32>
    %4 = arith.mulf %2, %3 : vector<64x256xf32>
    %c0_3 = arith.constant 0 : index
    %c0_4 = arith.constant 0 : index
    %5 = vector.load %arg3[%c0_3, %c0_4] : memref<64x1xf32, #tpu.memory_space<vmem>>, vector<64x1xf32>
    %6 = vector.broadcast %5 : vector<64x1xf32> to vector<64x256xf32>
    %7 = arith.addf %4, %6 : vector<64x256xf32>
    %cst = arith.constant 0.000000e+00 : f32
    %8 = vector.broadcast %cst : f32 to vector<64x256xf32>
    %9 = arith.maximumf %7, %8 : vector<64x256xf32>
    %c0_5 = arith.constant 0 : index
    %c0_6 = arith.constant 0 : index
    %10 = vector.load %arg4[%c0_5, %c0_6] : memref<64x64xbf16, #tpu.memory_space<vmem>>, vector<64x64xbf16>
    %11 = arith.truncf %9 : vector<64x256xf32> to vector<64x256xbf16>
    %cst_7 = arith.constant dense<0.000000e+00> : vector<64x256xf32>
    %12 = tpu.matmul %10, %11, %cst_7 {dimension_numbers = #tpu.dot_dimension_numbers<[1], [0], [0], [1], [0, 0, 1, 1], [], []>} : vector<64x64xbf16>, vector<64x256xbf16>, vector<64x256xf32> -> vector<64x256xf32>
    %c0_8 = arith.constant 0 : index
    %c0_9 = arith.constant 0 : index
    %13 = vector.load %arg5[%c0_8, %c0_9] : memref<64x1xf32, #tpu.memory_space<vmem>>, vector<64x1xf32>
    %14 = vector.broadcast %13 : vector<64x1xf32> to vector<64x256xf32>
    %15 = arith.addf %12, %14 : vector<64x256xf32>
    %cst_10 = arith.constant 0.000000e+00 : f32
    %16 = vector.broadcast %cst_10 : f32 to vector<64x256xf32>
    %17 = arith.maximumf %15, %16 : vector<64x256xf32>
    %c0_11 = arith.constant 0 : index
    %c0_12 = arith.constant 0 : index
    %18 = vector.load %arg6[%c0_11, %c0_12] : memref<64x64xbf16, #tpu.memory_space<vmem>>, vector<64x64xbf16>
    %19 = arith.truncf %17 : vector<64x256xf32> to vector<64x256xbf16>
    %cst_13 = arith.constant dense<0.000000e+00> : vector<64x256xf32>
    %20 = tpu.matmul %18, %19, %cst_13 {dimension_numbers = #tpu.dot_dimension_numbers<[1], [0], [0], [1], [0, 0, 1, 1], [], []>} : vector<64x64xbf16>, vector<64x256xbf16>, vector<64x256xf32> -> vector<64x256xf32>
    %c0_14 = arith.constant 0 : index
    %c0_15 = arith.constant 0 : index
    %21 = vector.load %arg7[%c0_14, %c0_15] : memref<64x1xf32, #tpu.memory_space<vmem>>, vector<64x1xf32>
    %22 = vector.broadcast %21 : vector<64x1xf32> to vector<64x256xf32>
    %23 = arith.addf %20, %22 : vector<64x256xf32>
    %cst_16 = arith.constant 0.000000e+00 : f32
    %24 = vector.broadcast %cst_16 : f32 to vector<64x256xf32>
    %25 = arith.maximumf %23, %24 : vector<64x256xf32>
    %c0_17 = arith.constant 0 : index
    %c0_18 = arith.constant 0 : index
    %26 = vector.load %arg8[%c0_17, %c0_18] : memref<64x1xf32, #tpu.memory_space<vmem>>, vector<64x1xf32>
    %27 = vector.broadcast %26 : vector<64x1xf32> to vector<64x256xf32>
    %28 = arith.mulf %27, %25 : vector<64x256xf32>
    %cst_19 = arith.constant dense<0.000000e+00> : vector<256xf32>
    %29 = vector.multi_reduction <add>, %28, %cst_19 [0] : vector<64x256xf32> to vector<256xf32>
    %30 = vector.shape_cast %29 : vector<256xf32> to vector<1x256xf32>
    %c0_20 = arith.constant 0 : index
    %c0_21 = arith.constant 0 : index
    %31 = vector.load %arg9[%c0_20, %c0_21] : memref<1x1xf32, #tpu.memory_space<vmem>>, vector<1x1xf32>
    %32 = vector.broadcast %31 : vector<1x1xf32> to vector<1x256xf32>
    %33 = arith.addf %30, %32 : vector<1x256xf32>
    %c0_22 = arith.constant 0 : index
    %c0_23 = arith.constant 0 : index
    %34 = vector.load %arg10[%c0_22, %c0_23] : memref<1x256xf32, #tpu.memory_space<vmem>>, vector<1x256xf32>
    tpu.vector_store %arg10[%c0_22, %c0_23], %33 {strides = array<i32>} : memref<1x256xf32, #tpu.memory_space<vmem>>, vector<1x256xf32>,
    return
  }
  func.func @transform_0(%arg0: i32) -> (i32, i32) {
    %c0_i32 = arith.constant 0 : i32
    %c0_i32_0 = arith.constant 0 : i32
    return %c0_i32, %arg0 : i32, i32
  }
  func.func @transform_1(%arg0: i32) -> (i32, i32) {
    %c0_i32 = arith.constant 0 : i32
    %c0_i32_0 = arith.constant 0 : i32
    %c0_i32_1 = arith.constant 0 : i32
    return %c0_i32, %c0_i32_0 : i32, i32
  }
  func.func @transform_2(%arg0: i32) -> (i32, i32) {
    %c0_i32 = arith.constant 0 : i32
    %c0_i32_0 = arith.constant 0 : i32
    %c0_i32_1 = arith.constant 0 : i32
    return %c0_i32, %c0_i32_0 : i32, i32
  }
  func.func @transform_3(%arg0: i32) -> (i32, i32) {
    %c0_i32 = arith.constant 0 : i32
    %c0_i32_0 = arith.constant 0 : i32
    %c0_i32_1 = arith.constant 0 : i32
    return %c0_i32, %c0_i32_0 : i32, i32
  }
  func.func @transform_4(%arg0: i32) -> (i32, i32) {
    %c0_i32 = arith.constant 0 : i32
    %c0_i32_0 = arith.constant 0 : i32
    %c0_i32_1 = arith.constant 0 : i32
    return %c0_i32, %c0_i32_0 : i32, i32
  }
  func.func @transform_5(%arg0: i32) -> (i32, i32) {
    %c0_i32 = arith.constant 0 : i32
    %c0_i32_0 = arith.constant 0 : i32
    %c0_i32_1 = arith.constant 0 : i32
    return %c0_i32, %c0_i32_0 : i32, i32
  }
  func.func @transform_6(%arg0: i32) -> (i32, i32) {
    %c0_i32 = arith.constant 0 : i32
    %c0_i32_0 = arith.constant 0 : i32
    %c0_i32_1 = arith.constant 0 : i32
    return %c0_i32, %c0_i32_0 : i32, i32
  }
  func.func @transform_7(%arg0: i32) -> (i32, i32) {
    %c0_i32 = arith.constant 0 : i32
    %c0_i32_0 = arith.constant 0 : i32
    %c0_i32_1 = arith.constant 0 : i32
    return %c0_i32, %c0_i32_0 : i32, i32
  }
  func.func @transform_8(%arg0: i32) -> (i32, i32) {
    %c0_i32 = arith.constant 0 : i32
    %c0_i32_0 = arith.constant 0 : i32
    %c0_i32_1 = arith.constant 0 : i32
    return %c0_i32, %c0_i32_0 : i32, i32
  }
  func.func @transform_9(%arg0: i32) -> (i32, i32) {
    %c0_i32 = arith.constant 0 : i32
    %c0_i32_0 = arith.constant 0 : i32
    return %c0_i32, %arg0 : i32, i32
  }
}

</mosaic_0001>

<llo_original>
// kernel: tpu_custom_call.1
$region0: #{tpu_custom_call.1}
  #allocation0 [shape = 'u32[]', space=smem, size = 0x4, offset = 0x4, fixed_abs, tag = 'smem constant byte address 0x4 - core index']
  #allocation1 [shape = 'u32[144,128]{1,0:T(1,128)}', space=vmem, size = 0x12000, scoped, tag = 'internal scratch']
  #allocation2 [shape = 'f32[1,1]{1,0:T(1,128)S(1)}', space=vmem, size = 0x200, scoped, tag = 'scoped memory for tpu_custom_call.1']
  %s0 = inlined_call_operand.vmem [shape: f32[1,512], index: 0, kind: input, shape index: {}]
  %s1 = inlined_call_operand.vmem [shape: f32[64,1], index: 1, kind: input, shape index: {}]
  %s2 = inlined_call_operand.vmem [shape: f32[64,1], index: 2, kind: input, shape index: {}]
  %s3 = inlined_call_operand.vmem [shape: bf16[64,64], index: 3, kind: input, shape index: {}]
  %s4 = inlined_call_operand.vmem [shape: f32[64,1], index: 4, kind: input, shape index: {}]
  %s5 = inlined_call_operand.vmem [shape: bf16[64,64], index: 5, kind: input, shape index: {}]
  %s6 = inlined_call_operand.vmem [shape: f32[64,1], index: 6, kind: input, shape index: {}]
  %s7 = inlined_call_operand.vmem [shape: f32[64,1], index: 7, kind: input, shape index: {}]
  %s8 = inlined_call_operand.<no memory space> [shape: f32[1,1], index: 8, kind: input, shape index: {}]
  %s9 = inlined_call_operand.hbm [shape: f32[1,512], index: 9, kind: output, shape index: {}]
  %s10 = sld [smem:[#allocation0]]
  $region69: #{tpu_custom_call.1} parent=0
    _
  %s12 = ssub.s32 1, %s10
  %s13 = scalar_select 0, %s12, %s10
  %v14 = vstv %s8
  %15 = vst [vmem:[#allocation2] sm:$0x1] %v14
  $region1: #{tpu_custom_call.1} parent=0
    #allocation3 [shape = 'u8[2048]{0}', space=vmem, size = 0x800, scoped, tag = 'output window, operand 0']
    #allocation4 [shape = 's32[2]{0}', space=sflag, size = 0x8, scoped, tag = 'scoped memory for tpu_custom_call.1']
    %16 = vsyncpa [#allocation4], 0
    %s17 = scalar_lea.sflag [#allocation4], 1
    %18 = vsyncpa %s17, 0
    loop: start=0, step=1, limit=4
    $region2: #{tpu_custom_call.1} parent=1 // loop_pre_header
      _
    $region3: #{tpu_custom_call.1} parent=1 // loop_header
      %s20 = sphi 0, %s24
      %p21 = scmp.ge.s32.totalorder %s20, 4
      %s30 = sphi 0, %s32
      %s33 = sphi 0, %s30
      %s34 = sphi 0, %s33
      %s50 = sphi 0, %s34
      %s54 = sphi 0, %s54
      %s56 = sphi 0, %s54
      %s57 = sphi 0, %s56
      %s71 = sphi 0, %s57
      %s75 = sphi 0, %s75
      %s77 = sphi 0, %s75
      %s78 = sphi 0, %s77
      %s92 = sphi 0, %s78
      %s96 = sphi 0, %s96
      %s98 = sphi 0, %s96
      %s99 = sphi 0, %s98
      %s113 = sphi 0, %s99
      %s117 = sphi 0, %s117
      %s119 = sphi 0, %s117
      %s120 = sphi 0, %s119
      %s134 = sphi 0, %s120
      %s138 = sphi 0, %s138
      %s140 = sphi 0, %s138
      %s141 = sphi 0, %s140
      %s155 = sphi 0, %s141
      %s159 = sphi 0, %s159
      %s161 = sphi 0, %s159
      %s162 = sphi 0, %s161
      %s176 = sphi 0, %s162
      %s180 = sphi 0, %s180
      %s182 = sphi 0, %s180
      %s183 = sphi 0, %s182
      %s197 = sphi 0, %s183
      %s201 = sphi 0, %s201
      %s203 = sphi 0, %s201
      %s204 = sphi 0, %s203
      %s218 = sphi 0, %s204
      %s224 = sphi 0, %s226
      %s227 = sphi 0, %s224
      %s228 = sphi 0, %s227
      %s244 = sphi 0, %s228
    $region4: #{tpu_custom_call.1} parent=1 // loop_header_branch
      %23 = sbr.rel (%p21) target = $region8
    $region5: #{tpu_custom_call.1} parent=1 // loop_body
      %s25 = ssub.s32 %s20, 1
      %s26 = ssub.s32 %s20, 2
      %s27 = sadd.s32 %s20, 1
      %s28 = ssub.s32 %s20, %s27
      %p29 = scmp.eq.s32.totalorder %s28, 0
      %s31 = sadd.s32 %s30, 1
      %s32 = scalar_select %p29, %s30, %s31
      %p35 = pneg %p29
      %p36 = scmp.eq.s32.totalorder %s20, 1
      %p37 = por %p35, %p36
      %p38 = scmp.ne.s32.totalorder %s30, %s33
      %p39 = scmp.eq.s32.totalorder %s20, 0
      %p40 = por %p38, %p39
      %p41 = scmp.ne.s32.totalorder %s30, %s33
      %p42 = scmp.eq.s32.totalorder %s25, 1
      %p43 = por %p41, %p42
      %p44 = scmp.ne.s32.totalorder %s33, %s34
      %p45 = scmp.eq.s32.totalorder %s25, 0
      %p46 = por %p44, %p45
      %p47 = scmp.ne.s32.totalorder %s33, %s34
      %p48 = scmp.eq.s32.totalorder %s26, 1
      %p49 = por %p47, %p48
      %p51 = scmp.ne.s32.totalorder %s34, %s50
      %p52 = scmp.eq.s32.totalorder %s26, 0
      %p53 = por %p51, %p52
      %s55 = sadd.s32 %s54, 1
      %p58 = scmp.eq.s32.totalorder %s20, 1
      %p59 = scmp.ne.s32.totalorder %s54, %s56
      %p60 = scmp.eq.s32.totalorder %s20, 0
      %p61 = por %p59, %p60
      %p62 = scmp.ne.s32.totalorder %s54, %s56
      %p63 = scmp.eq.s32.totalorder %s25, 1
      %p64 = por %p62, %p63
      %p65 = scmp.ne.s32.totalorder %s56, %s57
      %p66 = scmp.eq.s32.totalorder %s25, 0
      %p67 = por %p65, %p66
      %p68 = scmp.ne.s32.totalorder %s56, %s57
      %p69 = scmp.eq.s32.totalorder %s26, 1
      %p70 = por %p68, %p69
      %p72 = scmp.ne.s32.totalorder %s57, %s71
      %p73 = scmp.eq.s32.totalorder %s26, 0
      %p74 = por %p72, %p73
      %s76 = sadd.s32 %s75, 1
      %p79 = scmp.eq.s32.totalorder %s20, 1
      %p80 = scmp.ne.s32.totalorder %s75, %s77
      %p81 = scmp.eq.s32.totalorder %s20, 0
      %p82 = por %p80, %p81
      %p83 = scmp.ne.s32.totalorder %s75, %s77
      %p84 = scmp.eq.s32.totalorder %s25, 1
      %p85 = por %p83, %p84
      %p86 = scmp.ne.s32.totalorder %s77, %s78
      %p87 = scmp.eq.s32.totalorder %s25, 0
      %p88 = por %p86, %p87
      %p89 = scmp.ne.s32.totalorder %s77, %s78
      %p90 = scmp.eq.s32.totalorder %s26, 1
      %p91 = por %p89, %p90
      %p93 = scmp.ne.s32.totalorder %s78, %s92
      %p94 = scmp.eq.s32.totalorder %s26, 0
      %p95 = por %p93, %p94
      %s97 = sadd.s32 %s96, 1
      %p100 = scmp.eq.s32.totalorder %s20, 1
      %p101 = scmp.ne.s32.totalorder %s96, %s98
      %p102 = scmp.eq.s32.totalorder %s20, 0
      %p103 = por %p101, %p102
      %p104 = scmp.ne.s32.totalorder %s96, %s98
      %p105 = scmp.eq.s32.totalorder %s25, 1
      %p106 = por %p104, %p105
      %p107 = scmp.ne.s32.totalorder %s98, %s99
      %p108 = scmp.eq.s32.totalorder %s25, 0
      %p109 = por %p107, %p108
      %p110 = scmp.ne.s32.totalorder %s98, %s99
      %p111 = scmp.eq.s32.totalorder %s26, 1
      %p112 = por %p110, %p111
      %p114 = scmp.ne.s32.totalorder %s99, %s113
      %p115 = scmp.eq.s32.totalorder %s26, 0
      %p116 = por %p114, %p115
      %s118 = sadd.s32 %s117, 1
      %p121 = scmp.eq.s32.totalorder %s20, 1
      %p122 = scmp.ne.s32.totalorder %s117, %s119
      %p123 = scmp.eq.s32.totalorder %s20, 0
      %p124 = por %p122, %p123
      %p125 = scmp.ne.s32.totalorder %s117, %s119
      %p126 = scmp.eq.s32.totalorder %s25, 1
      %p127 = por %p125, %p126
      %p128 = scmp.ne.s32.totalorder %s119, %s120
      %p129 = scmp.eq.s32.totalorder %s25, 0
      %p130 = por %p128, %p129
      %p131 = scmp.ne.s32.totalorder %s119, %s120
      %p132 = scmp.eq.s32.totalorder %s26, 1
      %p133 = por %p131, %p132
      %p135 = scmp.ne.s32.totalorder %s120, %s134
      %p136 = scmp.eq.s32.totalorder %s26, 0
      %p137 = por %p135, %p136
      %s139 = sadd.s32 %s138, 1
      %p142 = scmp.eq.s32.totalorder %s20, 1
      %p143 = scmp.ne.s32.totalorder %s138, %s140
      %p144 = scmp.eq.s32.totalorder %s20, 0
      %p145 = por %p143, %p144
      %p146 = scmp.ne.s32.totalorder %s138, %s140
      %p147 = scmp.eq.s32.totalorder %s25, 1
      %p148 = por %p146, %p147
      %p149 = scmp.ne.s32.totalorder %s140, %s141
      %p150 = scmp.eq.s32.totalorder %s25, 0
      %p151 = por %p149, %p150
      %p152 = scmp.ne.s32.totalorder %s140, %s141
      %p153 = scmp.eq.s32.totalorder %s26, 1
      %p154 = por %p152, %p153
      %p156 = scmp.ne.s32.totalorder %s141, %s155
      %p157 = scmp.eq.s32.totalorder %s26, 0
      %p158 = por %p156, %p157
      %s160 = sadd.s32 %s159, 1
      %p163 = scmp.eq.s32.totalorder %s20, 1
      %p164 = scmp.ne.s32.totalorder %s159, %s161
      %p165 = scmp.eq.s32.totalorder %s20, 0
      %p166 = por %p164, %p165
      %p167 = scmp.ne.s32.totalorder %s159, %s161
      %p168 = scmp.eq.s32.totalorder %s25, 1
      %p169 = por %p167, %p168
      %p170 = scmp.ne.s32.totalorder %s161, %s162
      %p171 = scmp.eq.s32.totalorder %s25, 0
      %p172 = por %p170, %p171
      %p173 = scmp.ne.s32.totalorder %s161, %s162
      %p174 = scmp.eq.s32.totalorder %s26, 1
      %p175 = por %p173, %p174
      %p177 = scmp.ne.s32.totalorder %s162, %s176
      %p178 = scmp.eq.s32.totalorder %s26, 0
      %p179 = por %p177, %p178
      %s181 = sadd.s32 %s180, 1
      %p184 = scmp.eq.s32.totalorder %s20, 1
      %p185 = scmp.ne.s32.totalorder %s180, %s182
      %p186 = scmp.eq.s32.totalorder %s20, 0
      %p187 = por %p185, %p186
      %p188 = scmp.ne.s32.totalorder %s180, %s182
      %p189 = scmp.eq.s32.totalorder %s25, 1
      %p190 = por %p188, %p189
      %p191 = scmp.ne.s32.totalorder %s182, %s183
      %p192 = scmp.eq.s32.totalorder %s25, 0
      %p193 = por %p191, %p192
      %p194 = scmp.ne.s32.totalorder %s182, %s183
      %p195 = scmp.eq.s32.totalorder %s26, 1
      %p196 = por %p194, %p195
      %p198 = scmp.ne.s32.totalorder %s183, %s197
      %p199 = scmp.eq.s32.totalorder %s26, 0
      %p200 = por %p198, %p199
      %s202 = sadd.s32 %s201, 1
      %p205 = scmp.eq.s32.totalorder %s20, 1
      %p206 = scmp.ne.s32.totalorder %s201, %s203
      %p207 = scmp.eq.s32.totalorder %s20, 0
      %p208 = por %p206, %p207
      %p209 = scmp.ne.s32.totalorder %s201, %s203
      %p210 = scmp.eq.s32.totalorder %s25, 1
      %p211 = por %p209, %p210
      %p212 = scmp.ne.s32.totalorder %s203, %s204
      %p213 = scmp.eq.s32.totalorder %s25, 0
      %p214 = por %p212, %p213
      %p215 = scmp.ne.s32.totalorder %s203, %s204
      %p216 = scmp.eq.s32.totalorder %s26, 1
      %p217 = por %p215, %p216
      %p219 = scmp.ne.s32.totalorder %s204, %s218
      %p220 = scmp.eq.s32.totalorder %s26, 0
      %p221 = por %p219, %p220
      %s222 = ssub.s32 %s20, %s27
      %p223 = scmp.eq.s32.totalorder %s222, 0
      %s225 = sadd.s32 %s224, 1
      %s226 = scalar_select %p223, %s224, %s225
      %p229 = pneg %p223
      %p230 = scmp.eq.s32.totalorder %s20, 1
      %p231 = por %p229, %p230
      %p232 = scmp.ne.s32.totalorder %s224, %s227
      %p233 = scmp.eq.s32.totalorder %s20, 0
      %p234 = por %p232, %p233
      %p235 = scmp.ne.s32.totalorder %s224, %s227
      %p236 = scmp.eq.s32.totalorder %s25, 1
      %p237 = por %p235, %p236
      %p238 = scmp.ne.s32.totalorder %s227, %s228
      %p239 = scmp.eq.s32.totalorder %s25, 0
      %p240 = por %p238, %p239
      %p241 = scmp.ne.s32.totalorder %s227, %s228
      %p242 = scmp.eq.s32.totalorder %s26, 1
      %p243 = por %p241, %p242
      %p245 = scmp.ne.s32.totalorder %s228, %s244
      %p246 = scmp.eq.s32.totalorder %s26, 0
      %p247 = por %p245, %p246
      %p248 = scmp.le.s32.totalorder 1, %s20
      %p249 = scmp.lt.s32.totalorder %s20, 3
      %p250 = pnand %p248, %p249
      %p251 = pneg %p250
      // Predicated region
      $region9: #{tpu_custom_call.1} parent=5 // pred_check
        _
      $region10: #{tpu_custom_call.1} parent=5 // pred_check_branch
        %253 = sbr.rel (%p250) target = $region12
      $region11: #{tpu_custom_call.1} parent=5 // pred_region
        %s254 = ssub.s32 %s20, 1
        // Predicated region
        $region13: #{tpu_custom_call.1} parent=11 // pred_check
          %p255 = pneg %p67
        $region14: #{tpu_custom_call.1} parent=11 // pred_check_branch
          %257 = sbr.rel (%p255) target = $region16
        $region15: #{tpu_custom_call.1} parent=11 // pred_region
          _
        $region16: #{tpu_custom_call.1} parent=11 // pred_fallthru
          _
        // Predicated region
        $region17: #{tpu_custom_call.1} parent=11 // pred_check
          %p258 = pneg %p88
        $region18: #{tpu_custom_call.1} parent=11 // pred_check_branch
          %260 = sbr.rel (%p258) target = $region20
        $region19: #{tpu_custom_call.1} parent=11 // pred_region
          _
        $region20: #{tpu_custom_call.1} parent=11 // pred_fallthru
          _
        // Predicated region
        $region21: #{tpu_custom_call.1} parent=11 // pred_check
          %p261 = pneg %p109
        $region22: #{tpu_custom_call.1} parent=11 // pred_check_branch
          %263 = sbr.rel (%p261) target = $region24
        $region23: #{tpu_custom_call.1} parent=11 // pred_region
          _
        $region24: #{tpu_custom_call.1} parent=11 // pred_fallthru
          _
        // Predicated region
        $region25: #{tpu_custom_call.1} parent=11 // pred_check
          %p264 = pneg %p130
        $region26: #{tpu_custom_call.1} parent=11 // pred_check_branch
          %266 = sbr.rel (%p264) target = $region28
        $region27: #{tpu_custom_call.1} parent=11 // pred_region
          _
        $region28: #{tpu_custom_call.1} parent=11 // pred_fallthru
          _
        // Predicated region
        $region29: #{tpu_custom_call.1} parent=11 // pred_check
          %p267 = pneg %p151
        $region30: #{tpu_custom_call.1} parent=11 // pred_check_branch
          %269 = sbr.rel (%p267) target = $region32
        $region31: #{tpu_custom_call.1} parent=11 // pred_region
          _
        $region32: #{tpu_custom_call.1} parent=11 // pred_fallthru
          _
        // Predicated region
        $region33: #{tpu_custom_call.1} parent=11 // pred_check
          %p270 = pneg %p172
        $region34: #{tpu_custom_call.1} parent=11 // pred_check_branch
          %272 = sbr.rel (%p270) target = $region36
        $region35: #{tpu_custom_call.1} parent=11 // pred_region
          _
        $region36: #{tpu_custom_call.1} parent=11 // pred_fallthru
          _
        // Predicated region
        $region37: #{tpu_custom_call.1} parent=11 // pred_check
          %p273 = pneg %p193
        $region38: #{tpu_custom_call.1} parent=11 // pred_check_branch
          %275 = sbr.rel (%p273) target = $region40
        $region39: #{tpu_custom_call.1} parent=11 // pred_region
          _
        $region40: #{tpu_custom_call.1} parent=11 // pred_fallthru
          _
        // Predicated region
        $region41: #{tpu_custom_call.1} parent=11 // pred_check
          %p276 = pneg %p214
        $region42: #{tpu_custom_call.1} parent=11 // pred_check_branch
          %278 = sbr.rel (%p276) target = $region44
        $region43: #{tpu_custom_call.1} parent=11 // pred_region
          _
        $region44: #{tpu_custom_call.1} parent=11 // pred_fallthru
          _
      $region12: #{tpu_custom_call.1} parent=5 // pred_fallthru
        _
      %p279 = scmp.lt.s32.totalorder %s20, 2
      // Predicated region
      $region45: #{tpu_custom_call.1} parent=5 // pred_check
        %p280 = pneg %p279
      $region46: #{tpu_custom_call.1} parent=5 // pred_check_branch
        %282 = sbr.rel (%p280) target = $region48
      $region47: #{tpu_custom_call.1} parent=5 // pred_region
        // Predicated region
        $region49: #{tpu_custom_call.1} parent=47 // pred_check
          %p283 = pneg %p40
        $region50: #{tpu_custom_call.1} parent=47 // pred_check_branch
          %285 = sbr.rel (%p283) target = $region52
        $region51: #{tpu_custom_call.1} parent=47 // pred_region
          %s286 = smul.u32 2, %s20
          %p287 = scmp.lt.s32.totalorder %s286, 3
          %s288 = scalar_select %p287, %s286, 3
          %s289 = scalar_lea.vmem %s0, %s288
          %s290 = smul.u32 2, %s20
        $region52: #{tpu_custom_call.1} parent=47 // pred_fallthru
          _
      $region48: #{tpu_custom_call.1} parent=5 // pred_fallthru
        _
      %p291 = scmp.le.s32.totalorder 1, %s20
      %p292 = scmp.lt.s32.totalorder %s20, 3
      %p293 = pnand %p291, %p292
      %p294 = pneg %p293
      // Predicated region
      $region53: #{tpu_custom_call.1} parent=5 // pred_check
        _
      $region54: #{tpu_custom_call.1} parent=5 // pred_check_branch
        %296 = sbr.rel (%p293) target = $region56
      $region55: #{tpu_custom_call.1} parent=5 // pred_region
        %s297 = ssub.s32 %s20, 1
        %s298 = smul.u32 2, %s25
        %p299 = scmp.lt.s32.totalorder %s298, 3
        %s300 = scalar_select %p299, %s298, 3
        %s301 = scalar_lea.vmem %s0, %s300
        %p302 = pneg %p46
        %p303 = pneg %p43
        %p304 = pneg %p67
        %p305 = pneg %p64
        %p306 = pneg %p88
        %p307 = pneg %p85
        %p308 = pneg %p109
        %p309 = pneg %p106
        %p310 = pneg %p130
        %p311 = pneg %p127
        %p312 = pneg %p151
        %p313 = pneg %p148
        %p314 = pneg %p172
        %p315 = pneg %p169
        %p316 = pneg %p193
        %p317 = pneg %p190
        %p318 = pneg %p214
        %p319 = pneg %p211
        %p320 = pneg %p240
        %p321 = pneg %p237
        %s322 = sand.u32 %s227, 1
        %s323 = scalar_lea.sflag [#allocation4], %s322
        %s324 = sand.u32 %s227, 1
        %s325 = smul.addr %s324, 2
        %s326 = scalar_lea.vmem [#allocation3], %s325
        %s327 = smul.u32 2, %s25
        %p328 = scmp.lt.s32.totalorder %s327, 3
        %s329 = scalar_select %p328, %s327, 3
        %s330 = scalar_lea.vmem %s0, %s329
        %s331 = smul.u32 2, %s25
        %s332 = smul.u32 2, %s25
        %v334 = vld [vmem:[%s330] sm:$0x3]
        %v335 = vld [vmem:[%s1] sm:$0xff]
        %v336 = vld [vmem:[%s1 + $0x8] sm:$0xff]
        %v337 = vld [vmem:[%s1 + $0x10] sm:$0xff]
        %v338 = vld [vmem:[%s1 + $0x18] sm:$0xff]
        %v339 = vld [vmem:[%s1 + $0x20] sm:$0xff]
        %v340 = vld [vmem:[%s1 + $0x28] sm:$0xff]
        %v341 = vld [vmem:[%s1 + $0x30] sm:$0xff]
        %v342 = vld [vmem:[%s1 + $0x38] sm:$0xff]
        %344 = vset.pattern.permute.xlu0 0
        %345 = vperm.xlu0 %344, %v335
        %v346 = vpop.permute.xlu0 %345
        %349 = vset.pattern.permute.xlu0 0
        %350 = vperm.xlu0 %349, %v336
        %v351 = vpop.permute.xlu0 %350
        %354 = vset.pattern.permute.xlu0 0
        %355 = vperm.xlu0 %354, %v337
        %v356 = vpop.permute.xlu0 %355
        %359 = vset.pattern.permute.xlu0 0
        %360 = vperm.xlu0 %359, %v338
        %v361 = vpop.permute.xlu0 %360
        %364 = vset.pattern.permute.xlu0 0
        %365 = vperm.xlu0 %364, %v339
        %v366 = vpop.permute.xlu0 %365
        %369 = vset.pattern.permute.xlu0 0
        %370 = vperm.xlu0 %369, %v340
        %v371 = vpop.permute.xlu0 %370
        %374 = vset.pattern.permute.xlu0 0
        %375 = vperm.xlu0 %374, %v341
        %v376 = vpop.permute.xlu0 %375
        %379 = vset.pattern.permute.xlu0 0
        %380 = vperm.xlu0 %379, %v342
        %v381 = vpop.permute.xlu0 %380
        %v384 = vlaneseq
        %v385 = vshrl.u32 %v384, 7
        %v386 = vsub.s32 0, %v385
        %v387 = vrot.slane %v334, %v386
        %v388 = vlaneseq
        %v389 = vshrl.u32 %v388, 7
        %v390 = vsub.s32 1, %v389
        %v391 = vrot.slane %v334, %v390
        %v394 = vmul.f32 %v346, %v387
        %v395 = vmul.f32 %v346, %v391
        %v396 = vmul.f32 %v351, %v387
        %v397 = vmul.f32 %v351, %v391
        %v398 = vmul.f32 %v356, %v387
        %v399 = vmul.f32 %v356, %v391
        %v400 = vmul.f32 %v361, %v387
        %v401 = vmul.f32 %v361, %v391
        %v402 = vmul.f32 %v366, %v387
        %v403 = vmul.f32 %v366, %v391
        %v404 = vmul.f32 %v371, %v387
        %v405 = vmul.f32 %v371, %v391
        %v406 = vmul.f32 %v376, %v387
        %v407 = vmul.f32 %v376, %v391
        %v408 = vmul.f32 %v381, %v387
        %v409 = vmul.f32 %v381, %v391
        %v410 = vld [vmem:[%s2] sm:$0xff]
        %v411 = vld [vmem:[%s2 + $0x8] sm:$0xff]
        %v412 = vld [vmem:[%s2 + $0x10] sm:$0xff]
        %v413 = vld [vmem:[%s2 + $0x18] sm:$0xff]
        %v414 = vld [vmem:[%s2 + $0x20] sm:$0xff]
        %v415 = vld [vmem:[%s2 + $0x28] sm:$0xff]
        %v416 = vld [vmem:[%s2 + $0x30] sm:$0xff]
        %v417 = vld [vmem:[%s2 + $0x38] sm:$0xff]
        %419 = vset.pattern.permute.xlu0 0
        %420 = vperm.xlu0 %419, %v410
        %v421 = vpop.permute.xlu0 %420
        %424 = vset.pattern.permute.xlu0 0
        %425 = vperm.xlu0 %424, %v411
        %v426 = vpop.permute.xlu0 %425
        %429 = vset.pattern.permute.xlu0 0
        %430 = vperm.xlu0 %429, %v412
        %v431 = vpop.permute.xlu0 %430
        %434 = vset.pattern.permute.xlu0 0
        %435 = vperm.xlu0 %434, %v413
        %v436 = vpop.permute.xlu0 %435
        %439 = vset.pattern.permute.xlu0 0
        %440 = vperm.xlu0 %439, %v414
        %v441 = vpop.permute.xlu0 %440
        %444 = vset.pattern.permute.xlu0 0
        %445 = vperm.xlu0 %444, %v415
        %v446 = vpop.permute.xlu0 %445
        %449 = vset.pattern.permute.xlu0 0
        %450 = vperm.xlu0 %449, %v416
        %v451 = vpop.permute.xlu0 %450
        %454 = vset.pattern.permute.xlu0 0
        %455 = vperm.xlu0 %454, %v417
        %v456 = vpop.permute.xlu0 %455
        %v458 = vadd.f32 %v394, %v421
        %v459 = vadd.f32 %v395, %v421
        %v460 = vadd.f32 %v396, %v426
        %v461 = vadd.f32 %v397, %v426
        %v462 = vadd.f32 %v398, %v431
        %v463 = vadd.f32 %v399, %v431
        %v464 = vadd.f32 %v400, %v436
        %v465 = vadd.f32 %v401, %v436
        %v466 = vadd.f32 %v402, %v441
        %v467 = vadd.f32 %v403, %v441
        %v468 = vadd.f32 %v404, %v446
        %v469 = vadd.f32 %v405, %v446
        %v470 = vadd.f32 %v406, %v451
        %v471 = vadd.f32 %v407, %v451
        %v472 = vadd.f32 %v408, %v456
        %v473 = vadd.f32 %v409, %v456
        %v474 = vmax.f32 %v458, 0.0
        %v475 = vmax.f32 %v459, 0.0
        %v476 = vmax.f32 %v460, 0.0
        %v477 = vmax.f32 %v461, 0.0
        %v478 = vmax.f32 %v462, 0.0
        %v479 = vmax.f32 %v463, 0.0
        %v480 = vmax.f32 %v464, 0.0
        %v481 = vmax.f32 %v465, 0.0
        %v482 = vmax.f32 %v466, 0.0
        %v483 = vmax.f32 %v467, 0.0
        %v484 = vmax.f32 %v468, 0.0
        %v485 = vmax.f32 %v469, 0.0
        %v486 = vmax.f32 %v470, 0.0
        %v487 = vmax.f32 %v471, 0.0
        %v488 = vmax.f32 %v472, 0.0
        %v489 = vmax.f32 %v473, 0.0
        %v490 = vld [vmem:[%s3] sm:$0xf]
        %v491 = vld [vmem:[%s3 + $0x4] sm:$0xf]
        %v492 = vld [vmem:[%s3 + $0x8] sm:$0xf]
        %v493 = vld [vmem:[%s3 + $0xc] sm:$0xf]
        %v494 = vld [vmem:[%s3 + $0x10] sm:$0xf]
        %v495 = vld [vmem:[%s3 + $0x14] sm:$0xf]
        %v496 = vld [vmem:[%s3 + $0x18] sm:$0xf]
        %v497 = vld [vmem:[%s3 + $0x1c] sm:$0xf]
        %v498 = vpack.c.bf16 %v476, %v474
        %v499 = vpack.c.bf16 %v477, %v475
        %v500 = vpack.c.bf16 %v480, %v478
        %v501 = vpack.c.bf16 %v481, %v479
        %v502 = vpack.c.bf16 %v484, %v482
        %v503 = vpack.c.bf16 %v485, %v483
        %v504 = vpack.c.bf16 %v488, %v486
        %v505 = vpack.c.bf16 %v489, %v487
        %v506 = vld [vmem:[%s4] sm:$0xff]
        %v507 = vld [vmem:[%s4 + $0x8] sm:$0xff]
        %v508 = vld [vmem:[%s4 + $0x10] sm:$0xff]
        %v509 = vld [vmem:[%s4 + $0x18] sm:$0xff]
        %v510 = vld [vmem:[%s4 + $0x20] sm:$0xff]
        %v511 = vld [vmem:[%s4 + $0x28] sm:$0xff]
        %v512 = vld [vmem:[%s4 + $0x30] sm:$0xff]
        %v513 = vld [vmem:[%s4 + $0x38] sm:$0xff]
        %515 = vset.pattern.permute.xlu0 0
        %516 = vperm.xlu0 %515, %v506
        %v517 = vpop.permute.xlu0 %516
        %520 = vset.pattern.permute.xlu0 0
        %521 = vperm.xlu0 %520, %v507
        %v522 = vpop.permute.xlu0 %521
        %525 = vset.pattern.permute.xlu0 0
        %526 = vperm.xlu0 %525, %v508
        %v527 = vpop.permute.xlu0 %526
        %530 = vset.pattern.permute.xlu0 0
        %531 = vperm.xlu0 %530, %v509
        %v532 = vpop.permute.xlu0 %531
        %535 = vset.pattern.permute.xlu0 0
        %536 = vperm.xlu0 %535, %v510
        %v537 = vpop.permute.xlu0 %536
        %540 = vset.pattern.permute.xlu0 0
        %541 = vperm.xlu0 %540, %v511
        %v542 = vpop.permute.xlu0 %541
        %545 = vset.pattern.permute.xlu0 0
        %546 = vperm.xlu0 %545, %v512
        %v547 = vpop.permute.xlu0 %546
        %550 = vset.pattern.permute.xlu0 0
        %551 = vperm.xlu0 %550, %v513
        %v552 = vpop.permute.xlu0 %551
        %v562 = vunpack.c.l.b16 %v490
        %v563 = vunpack.c.l.b16 %v491
        %v564 = vunpack.c.l.b16 %v492
        %v565 = vunpack.c.l.b16 %v493
        %v566 = vunpack.c.l.b16 %v494
        %v567 = vunpack.c.l.b16 %v495
        %v568 = vunpack.c.l.b16 %v496
        %v569 = vunpack.c.l.b16 %v497
        %v570 = vpack.c.b16 %v563, %v562
        %v571 = vpack.c.b16 %v565, %v564
        %v572 = vpack.c.b16 %v567, %v566
        %v573 = vpack.c.b16 %v569, %v568
        %vm574 = vcmask 523264
        %v576 = vsel %vm574, %v570, 0
        %v579 = vsel %vm574, %v571, 0
        %v582 = vsel %vm574, %v572, 0
        %v585 = vsel %vm574, %v573, 0
        %587 = vmatprep.subr.bf16.mxu0 %v499
        %588 = vmatpush1.bf16.msra.mxu0 %v498
        %589 = vmatprep.subr.bf16.mxu0 %v501
        %590 = vmatpush1.bf16.msra.mxu0 %v500
        %591 = vmatprep.subr.bf16.mxu0 %v503
        %592 = vmatpush1.bf16.msra.mxu0 %v502
        %593 = vmatprep.subr.bf16.mxu0 %v505
        %594 = vmatpush1.bf16.msra.mxu0 %v504
        %595 = vmatprep.subr.bf16.mxu0 0
        %596 = vmatpush1.bf16.msra.mxu0 0
        %597 = vmatprep.subr.bf16.mxu0 0
        %598 = vmatpush1.bf16.msra.mxu0 0
        %599 = vmatprep.subr.bf16.mxu0 0
        %600 = vmatpush1.bf16.msra.mxu0 0
        %601 = vmatprep.subr.bf16.mxu0 0
        %602 = vmatpush1.bf16.msra.mxu0 0
        %603 = vmatprep.subr.bf16.mxu0 0
        %604 = vmatpush1.bf16.msra.mxu0 0
        %605 = vmatprep.subr.bf16.mxu0 0
        %606 = vmatpush1.bf16.msra.mxu0 0
        %607 = vmatprep.subr.bf16.mxu0 0
        %608 = vmatpush1.bf16.msra.mxu0 0
        %609 = vmatprep.subr.bf16.mxu0 0
        %610 = vmatpush1.bf16.msra.mxu0 0
        %611 = vmatprep.subr.bf16.mxu0 0
        %612 = vmatpush1.bf16.msra.mxu0 0
        %613 = vmatprep.subr.bf16.mxu0 0
        %614 = vmatpush1.bf16.msra.mxu0 0
        %615 = vmatprep.subr.bf16.mxu0 0
        %616 = vmatpush1.bf16.msra.mxu0 0
        %617 = vmatprep.subr.bf16.mxu0 0
        %618 = vmatpush1.bf16.msra.mxu0 0
        %619 = vmatprep.mubr.bf16.mxu0 0
        %620 = vmatmul.mubr.bf16.gmra.mrb[0].mxu0 %v576
        %v621 = vpop.f32.mrb[0].mxu0
        %v622 = vadd.f32 %v517, %v621
        %v623 = vpop.f32.mrb[0].mxu0
        %v624 = vadd.f32 %v517, %v623
        %v625 = vpop.f32.mrb[0].mxu0
        %v626 = vadd.f32 %v522, %v625
        %v627 = vpop.f32.mrb[0].mxu0
        %v628 = vadd.f32 %v522, %v627
        %629 = vmatprep.mubr.bf16.mxu0 0
        %630 = vmatmul.mubr.bf16.gmra.mrb[0].mxu0 %v579
        %v631 = vpop.f32.mrb[0].mxu0
        %v632 = vadd.f32 %v527, %v631
        %v633 = vpop.f32.mrb[0].mxu0
        %v634 = vadd.f32 %v527, %v633
        %v635 = vpop.f32.mrb[0].mxu0
        %v636 = vadd.f32 %v532, %v635
        %v637 = vpop.f32.mrb[0].mxu0
        %v638 = vadd.f32 %v532, %v637
        %639 = vmatprep.mubr.bf16.mxu0 0
        %640 = vmatmul.mubr.bf16.gmra.mrb[0].mxu0 %v582
        %v641 = vpop.f32.mrb[0].mxu0
        %v642 = vadd.f32 %v537, %v641
        %v643 = vpop.f32.mrb[0].mxu0
        %v644 = vadd.f32 %v537, %v643
        %v645 = vpop.f32.mrb[0].mxu0
        %v646 = vadd.f32 %v542, %v645
        %v647 = vpop.f32.mrb[0].mxu0
        %v648 = vadd.f32 %v542, %v647
        %649 = vmatprep.mubr.bf16.mxu0 0
        %650 = vmatmul.mubr.bf16.gmra.mrb[0].mxu0 %v585
        %v651 = vpop.f32.mrb[0].mxu0
        %v652 = vadd.f32 %v547, %v651
        %v653 = vpop.f32.mrb[0].mxu0
        %v654 = vadd.f32 %v547, %v653
        %v655 = vpop.f32.mrb[0].mxu0
        %v656 = vadd.f32 %v552, %v655
        %v657 = vpop.f32.mrb[0].mxu0
        %v658 = vadd.f32 %v552, %v657
        %659 = vdwg.mxu0
        %v660 = vmax.f32 %v622, 0.0
        %v661 = vmax.f32 %v624, 0.0
        %v662 = vmax.f32 %v626, 0.0
        %v663 = vmax.f32 %v628, 0.0
        %v664 = vmax.f32 %v632, 0.0
        %v665 = vmax.f32 %v634, 0.0
        %v666 = vmax.f32 %v636, 0.0
        %v667 = vmax.f32 %v638, 0.0
        %v668 = vmax.f32 %v642, 0.0
        %v669 = vmax.f32 %v644, 0.0
        %v670 = vmax.f32 %v646, 0.0
        %v671 = vmax.f32 %v648, 0.0
        %v672 = vmax.f32 %v652, 0.0
        %v673 = vmax.f32 %v654, 0.0
        %v674 = vmax.f32 %v656, 0.0
        %v675 = vmax.f32 %v658, 0.0
        %v676 = vld [vmem:[%s5] sm:$0xf]
        %v677 = vld [vmem:[%s5 + $0x4] sm:$0xf]
        %v678 = vld [vmem:[%s5 + $0x8] sm:$0xf]
        %v679 = vld [vmem:[%s5 + $0xc] sm:$0xf]
        %v680 = vld [vmem:[%s5 + $0x10] sm:$0xf]
        %v681 = vld [vmem:[%s5 + $0x14] sm:$0xf]
        %v682 = vld [vmem:[%s5 + $0x18] sm:$0xf]
        %v683 = vld [vmem:[%s5 + $0x1c] sm:$0xf]
        %v684 = vpack.c.bf16 %v662, %v660
        %v685 = vpack.c.bf16 %v663, %v661
        %v686 = vpack.c.bf16 %v666, %v664
        %v687 = vpack.c.bf16 %v667, %v665
        %v688 = vpack.c.bf16 %v670, %v668
        %v689 = vpack.c.bf16 %v671, %v669
        %v690 = vpack.c.bf16 %v674, %v672
        %v691 = vpack.c.bf16 %v675, %v673
        %v692 = vld [vmem:[%s6] sm:$0xff]
        %v693 = vld [vmem:[%s6 + $0x8] sm:$0xff]
        %v694 = vld [vmem:[%s6 + $0x10] sm:$0xff]
        %v695 = vld [vmem:[%s6 + $0x18] sm:$0xff]
        %v696 = vld [vmem:[%s6 + $0x20] sm:$0xff]
        %v697 = vld [vmem:[%s6 + $0x28] sm:$0xff]
        %v698 = vld [vmem:[%s6 + $0x30] sm:$0xff]
        %v699 = vld [vmem:[%s6 + $0x38] sm:$0xff]
        %701 = vset.pattern.permute.xlu0 0
        %702 = vperm.xlu0 %701, %v692
        %v703 = vpop.permute.xlu0 %702
        %706 = vset.pattern.permute.xlu0 0
        %707 = vperm.xlu0 %706, %v693
        %v708 = vpop.permute.xlu0 %707
        %711 = vset.pattern.permute.xlu0 0
        %712 = vperm.xlu0 %711, %v694
        %v713 = vpop.permute.xlu0 %712
        %716 = vset.pattern.permute.xlu0 0
        %717 = vperm.xlu0 %716, %v695
        %v718 = vpop.permute.xlu0 %717
        %721 = vset.pattern.permute.xlu0 0
        %722 = vperm.xlu0 %721, %v696
        %v723 = vpop.permute.xlu0 %722
        %726 = vset.pattern.permute.xlu0 0
        %727 = vperm.xlu0 %726, %v697
        %v728 = vpop.permute.xlu0 %727
        %731 = vset.pattern.permute.xlu0 0
        %732 = vperm.xlu0 %731, %v698
        %v733 = vpop.permute.xlu0 %732
        %736 = vset.pattern.permute.xlu0 0
        %737 = vperm.xlu0 %736, %v699
        %v738 = vpop.permute.xlu0 %737
        %v748 = vunpack.c.l.b16 %v676
        %v749 = vunpack.c.l.b16 %v677
        %v750 = vunpack.c.l.b16 %v678
        %v751 = vunpack.c.l.b16 %v679
        %v752 = vunpack.c.l.b16 %v680
        %v753 = vunpack.c.l.b16 %v681
        %v754 = vunpack.c.l.b16 %v682
        %v755 = vunpack.c.l.b16 %v683
        %v756 = vpack.c.b16 %v749, %v748
        %v757 = vpack.c.b16 %v751, %v750
        %v758 = vpack.c.b16 %v753, %v752
        %v759 = vpack.c.b16 %v755, %v754
        %v761 = vsel %vm574, %v756, 0
        %v764 = vsel %vm574, %v757, 0
        %v767 = vsel %vm574, %v758, 0
        %v770 = vsel %vm574, %v759, 0
        %772 = vmatprep.subr.bf16.mxu0 %v685
        %773 = vmatpush1.bf16.msra.mxu0 %v684
        %774 = vmatprep.subr.bf16.mxu0 %v687
        %775 = vmatpush1.bf16.msra.mxu0 %v686
        %776 = vmatprep.subr.bf16.mxu0 %v689
        %777 = vmatpush1.bf16.msra.mxu0 %v688
        %778 = vmatprep.subr.bf16.mxu0 %v691
        %779 = vmatpush1.bf16.msra.mxu0 %v690
        %780 = vmatprep.subr.bf16.mxu0 0
        %781 = vmatpush1.bf16.msra.mxu0 0
        %782 = vmatprep.subr.bf16.mxu0 0
        %783 = vmatpush1.bf16.msra.mxu0 0
        %784 = vmatprep.subr.bf16.mxu0 0
        %785 = vmatpush1.bf16.msra.mxu0 0
        %786 = vmatprep.subr.bf16.mxu0 0
        %787 = vmatpush1.bf16.msra.mxu0 0
        %788 = vmatprep.subr.bf16.mxu0 0
        %789 = vmatpush1.bf16.msra.mxu0 0
        %790 = vmatprep.subr.bf16.mxu0 0
        %791 = vmatpush1.bf16.msra.mxu0 0
        %792 = vmatprep.subr.bf16.mxu0 0
        %793 = vmatpush1.bf16.msra.mxu0 0
        %794 = vmatprep.subr.bf16.mxu0 0
        %795 = vmatpush1.bf16.msra.mxu0 0
        %796 = vmatprep.subr.bf16.mxu0 0
        %797 = vmatpush1.bf16.msra.mxu0 0
        %798 = vmatprep.subr.bf16.mxu0 0
        %799 = vmatpush1.bf16.msra.mxu0 0
        %800 = vmatprep.subr.bf16.mxu0 0
        %801 = vmatpush1.bf16.msra.mxu0 0
        %802 = vmatprep.subr.bf16.mxu0 0
        %803 = vmatpush1.bf16.msra.mxu0 0
        %804 = vmatprep.mubr.bf16.mxu0 0
        %805 = vmatmul.mubr.bf16.gmra.mrb[0].mxu0 %v761
        %v806 = vpop.f32.mrb[0].mxu0
        %v807 = vadd.f32 %v703, %v806
        %v808 = vpop.f32.mrb[0].mxu0
        %v809 = vadd.f32 %v703, %v808
        %v810 = vpop.f32.mrb[0].mxu0
        %v811 = vadd.f32 %v708, %v810
        %v812 = vpop.f32.mrb[0].mxu0
        %v813 = vadd.f32 %v708, %v812
        %814 = vmatprep.mubr.bf16.mxu0 0
        %815 = vmatmul.mubr.bf16.gmra.mrb[0].mxu0 %v764
        %v816 = vpop.f32.mrb[0].mxu0
        %v817 = vadd.f32 %v713, %v816
        %v818 = vpop.f32.mrb[0].mxu0
        %v819 = vadd.f32 %v713, %v818
        %v820 = vpop.f32.mrb[0].mxu0
        %v821 = vadd.f32 %v718, %v820
        %v822 = vpop.f32.mrb[0].mxu0
        %v823 = vadd.f32 %v718, %v822
        %824 = vmatprep.mubr.bf16.mxu0 0
        %825 = vmatmul.mubr.bf16.gmra.mrb[0].mxu0 %v767
        %v826 = vpop.f32.mrb[0].mxu0
        %v827 = vadd.f32 %v723, %v826
        %v828 = vpop.f32.mrb[0].mxu0
        %v829 = vadd.f32 %v723, %v828
        %v830 = vpop.f32.mrb[0].mxu0
        %v831 = vadd.f32 %v728, %v830
        %v832 = vpop.f32.mrb[0].mxu0
        %v833 = vadd.f32 %v728, %v832
        %834 = vmatprep.mubr.bf16.mxu0 0
        %835 = vmatmul.mubr.bf16.gmra.mrb[0].mxu0 %v770
        %v836 = vpop.f32.mrb[0].mxu0
        %v837 = vadd.f32 %v733, %v836
        %v838 = vpop.f32.mrb[0].mxu0
        %v839 = vadd.f32 %v733, %v838
        %v840 = vpop.f32.mrb[0].mxu0
        %v841 = vadd.f32 %v738, %v840
        %v842 = vpop.f32.mrb[0].mxu0
        %v843 = vadd.f32 %v738, %v842
        %844 = vdwg.mxu0
        %v845 = vmax.f32 %v807, 0.0
        %v846 = vmax.f32 %v809, 0.0
        %v847 = vmax.f32 %v811, 0.0
        %v848 = vmax.f32 %v813, 0.0
        %v849 = vmax.f32 %v817, 0.0
        %v850 = vmax.f32 %v819, 0.0
        %v851 = vmax.f32 %v821, 0.0
        %v852 = vmax.f32 %v823, 0.0
        %v853 = vmax.f32 %v827, 0.0
        %v854 = vmax.f32 %v829, 0.0
        %v855 = vmax.f32 %v831, 0.0
        %v856 = vmax.f32 %v833, 0.0
        %v857 = vmax.f32 %v837, 0.0
        %v858 = vmax.f32 %v839, 0.0
        %v859 = vmax.f32 %v841, 0.0
        %v860 = vmax.f32 %v843, 0.0
        %v861 = vld [vmem:[%s7] sm:$0xff]
        %v862 = vld [vmem:[%s7 + $0x8] sm:$0xff]
        %v863 = vld [vmem:[%s7 + $0x10] sm:$0xff]
        %v864 = vld [vmem:[%s7 + $0x18] sm:$0xff]
        %v865 = vld [vmem:[%s7 + $0x20] sm:$0xff]
        %v866 = vld [vmem:[%s7 + $0x28] sm:$0xff]
        %v867 = vld [vmem:[%s7 + $0x30] sm:$0xff]
        %v868 = vld [vmem:[%s7 + $0x38] sm:$0xff]
        %870 = vset.pattern.permute.xlu0 0
        %871 = vperm.xlu0 %870, %v861
        %v872 = vpop.permute.xlu0 %871
        %875 = vset.pattern.permute.xlu0 0
        %876 = vperm.xlu0 %875, %v862
        %v877 = vpop.permute.xlu0 %876
        %880 = vset.pattern.permute.xlu0 0
        %881 = vperm.xlu0 %880, %v863
        %v882 = vpop.permute.xlu0 %881
        %885 = vset.pattern.permute.xlu0 0
        %886 = vperm.xlu0 %885, %v864
        %v887 = vpop.permute.xlu0 %886
        %890 = vset.pattern.permute.xlu0 0
        %891 = vperm.xlu0 %890, %v865
        %v892 = vpop.permute.xlu0 %891
        %895 = vset.pattern.permute.xlu0 0
        %896 = vperm.xlu0 %895, %v866
        %v897 = vpop.permute.xlu0 %896
        %900 = vset.pattern.permute.xlu0 0
        %901 = vperm.xlu0 %900, %v867
        %v902 = vpop.permute.xlu0 %901
        %905 = vset.pattern.permute.xlu0 0
        %906 = vperm.xlu0 %905, %v868
        %v907 = vpop.permute.xlu0 %906
        %v909 = vmul.f32 %v872, %v845
        %v910 = vmul.f32 %v872, %v846
        %v911 = vmul.f32 %v877, %v847
        %v912 = vmul.f32 %v877, %v848
        %v913 = vmul.f32 %v882, %v849
        %v914 = vmul.f32 %v882, %v850
        %v915 = vmul.f32 %v887, %v851
        %v916 = vmul.f32 %v887, %v852
        %v917 = vmul.f32 %v892, %v853
        %v918 = vmul.f32 %v892, %v854
        %v919 = vmul.f32 %v897, %v855
        %v920 = vmul.f32 %v897, %v856
        %v921 = vmul.f32 %v902, %v857
        %v922 = vmul.f32 %v902, %v858
        %v923 = vmul.f32 %v907, %v859
        %v924 = vmul.f32 %v907, %v860
        %v925 = vadd.f32 %v909, %v911
        %v926 = vadd.f32 %v925, %v913
        %v927 = vadd.f32 %v926, %v915
        %v928 = vadd.f32 %v927, %v917
        %v929 = vadd.f32 %v928, %v919
        %v930 = vadd.f32 %v929, %v921
        %v931 = vadd.f32 %v930, %v923
        %v932 = vrot.slane %v931, 4
        %v933 = vadd.f32 %v931, %v932
        %v934 = vrot.slane %v933, 2
        %v935 = vadd.f32 %v933, %v934
        %v936 = vrot.slane %v935, 1
        %v937 = vadd.f32 %v935, %v936
        %v938 = vadd.f32 %v910, %v912
        %v939 = vadd.f32 %v938, %v914
        %v940 = vadd.f32 %v939, %v916
        %v941 = vadd.f32 %v940, %v918
        %v942 = vadd.f32 %v941, %v920
        %v943 = vadd.f32 %v942, %v922
        %v944 = vadd.f32 %v943, %v924
        %v945 = vrot.slane %v944, 4
        %v946 = vadd.f32 %v944, %v945
        %v947 = vrot.slane %v946, 2
        %v948 = vadd.f32 %v946, %v947
        %v949 = vrot.slane %v948, 1
        %v950 = vadd.f32 %v948, %v949
        %v951 = vld [vmem:[#allocation2] sm:$0x1]
        %953 = vset.pattern.permute.xlu0 0
        %954 = vperm.xlu0 %953, %v951
        %v955 = vpop.permute.xlu0 %954
        %v957 = vlaneseq
        %v958 = vshrl.u32 %v957, 7
        %v959 = vsub.s32 0, %v958
        %v960 = vrot.slane %v955, %v959
        %v961 = vadd.f32 %v937, %v960
        %v962 = vadd.f32 %v950, %v960
        %v965 = vcombine.low %v961, %v962
        %v967 = vunpack.c.l.s4 1966171168
        %v968 = vunpack.c.0.s8 %v967
        %v969 = vlaneseq
        %v970 = vshrl.u32 %v969, 7
        %v971 = vsub.s32 %v968, %v970
        %v972 = vrot.slane %v965, %v971
        %v974 = vunpack.c.l.s4 1966171168
        %v975 = vunpack.c.0.s8 %v974
        %v976 = vlaneseq
        %v977 = vshrl.u32 %v976, 7
        %v978 = vsub.s32 %v975, %v977
        %v979 = vrot.slane %v972, %v978
        %v981 = vlaneseq
        %vm982 = vcmp.ge.s32.totalorder %v981, 0
        %vm983 = vcmp.lt.s32.totalorder %v981, 256
        %vm984 = vmand %vm982, %vm983
        %985 = vst.msk [vmem:[%s326] sm:$0x3] %vm984, %v979
        %s986 = sand.u32 %s227, 1
        %s987 = scalar_lea.sflag [#allocation4], %s986
        %s988 = sand.u32 %s227, 1
        %s989 = smul.addr %s988, 2
        %s990 = scalar_lea.vmem [#allocation3], %s989
        // Predicated region
        $region57: #{tpu_custom_call.1} parent=55 // pred_check
          %p991 = pneg %p237
        $region58: #{tpu_custom_call.1} parent=55 // pred_check_branch
          %993 = sbr.rel (%p991) target = $region60
        $region59: #{tpu_custom_call.1} parent=55 // pred_region
          %s994 = smul.u32 2, %s25
          %s996 = ssub.s32 32, 32
          %997 = vsyncadd %s987, %s996
          %s998 = smul.addr %s994, 16
          %s999 = scalar_lea.hbm %s9, %s998
          %s1001 = sshll.u32 %s990, 4
          %s1002 = int_to_ptr.vmem [resolvable:$true] %s1001
          %1004 = dma.vmem_to_hbm [thread:$0]  %s1002, 32, %s999, %s987
        $region60: #{tpu_custom_call.1} parent=55 // pred_fallthru
          _
      $region56: #{tpu_custom_call.1} parent=5 // pred_fallthru
        _
      %p1005 = scmp.le.s32.totalorder 2, %s20
      // Predicated region
      $region61: #{tpu_custom_call.1} parent=5 // pred_check
        %p1006 = pneg %p1005
      $region62: #{tpu_custom_call.1} parent=5 // pred_check_branch
        %1008 = sbr.rel (%p1006) target = $region64
      $region63: #{tpu_custom_call.1} parent=5 // pred_region
        %s1009 = ssub.s32 %s20, 2
        // Predicated region
        $region65: #{tpu_custom_call.1} parent=63 // pred_check
          %p1010 = pneg %p243
        $region66: #{tpu_custom_call.1} parent=63 // pred_check_branch
          %1012 = sbr.rel (%p1010) target = $region68
        $region67: #{tpu_custom_call.1} parent=63 // pred_region
          %s1013 = sand.u32 %s228, 1
          %s1014 = scalar_lea.sflag [#allocation4], %s1013
          %s1015 = sand.u32 %s228, 1
          %s1016 = smul.addr %s1015, 2
          %s1017 = scalar_lea.vmem [#allocation3], %s1016
          %1018 = dma.done %s1014, 32
        $region68: #{tpu_custom_call.1} parent=63 // pred_fallthru
          _
      $region64: #{tpu_custom_call.1} parent=5 // pred_fallthru
        _
    $region6: #{tpu_custom_call.1} parent=1 // loop_footer
      %s24 = sadd.s32 1, %s20
    $region7: #{tpu_custom_call.1} parent=1 // loop_footer_branch
      %19 = sbr.rel target = $region3
    $region8: #{tpu_custom_call.1} parent=1 // loop_exit
      _
    %1019 = vsyncpa [#allocation4], 1
    %s1020 = scalar_lea.sflag [#allocation4], 1
    %1021 = vsyncpa %s1020, 1

</llo_original>
